<compile_context>
chip_gen: v7x
topology: tpu7x:2x2x1
jax: 0.10.0
libtpu: 0.0.40
codegen_flags: <defaults>
</compile_context>

<pallas_src>
import functools

import jax
import jax.numpy as jnp
from jax.experimental import pallas as pl
from jax.experimental.pallas import tpu as pltpu


def _decoder_kernel(rep_ref, x_ref,
                    w1_ref, b1_ref, w2_ref, b2_ref,
                    wmu_ref, bmu_ref, wsg_ref, bsg_ref,
                    mu_ref, sigma_ref,
                    cat_ref,
                    *, rep_dim, x_dim):
    # In-kernel concat(rep, x) into a VMEM scratch -> one K=Din MXU pass
    # (keeps the "no HBM concat" property of the original design).
    cat_ref[:, :rep_dim] = rep_ref[...].astype(jnp.float32)
    cat_ref[:, rep_dim:rep_dim + x_dim] = x_ref[...].astype(jnp.float32)
    h_in = cat_ref[...].astype(jnp.bfloat16)

    # Layer 1 + ReLU (bf16 MXU inputs, f32 accumulation / elementwise).
    h1 = jnp.dot(h_in, w1_ref[...], preferred_element_type=jnp.float32)
    h1 = jnp.maximum(h1 + b1_ref[...], 0.0)

    # Layer 2 + ReLU.
    h2 = jnp.dot(h1.astype(jnp.bfloat16), w2_ref[...],
                 preferred_element_type=jnp.float32)
    h2 = jnp.maximum(h2 + b2_ref[...], 0.0)
    h2b = h2.astype(jnp.bfloat16)

    # Heads: narrow outputs, softplus only on the sigma lanes.
    mu = jnp.dot(h2b, wmu_ref[...], preferred_element_type=jnp.float32) + bmu_ref[...]
    log_sigma = (jnp.dot(h2b, wsg_ref[...], preferred_element_type=jnp.float32)
                 + bsg_ref[...])
    mu_ref[...] = mu
    sigma_ref[...] = 0.1 + 0.9 * jnp.logaddexp(log_sigma, 0.0)  # softplus


def prepare_decoder_params(params):
    """One-time prep: weights -> bf16 [in, out], biases -> f32 [1, out]."""
    w1, b1, w2, b2, wmu, bmu, wsg, bsg = params
    bf = lambda w: w.astype(jnp.bfloat16)
    fb = lambda b: b.astype(jnp.float32).reshape(1, -1)
    return (bf(w1), fb(b1), bf(w2), fb(b2), bf(wmu), fb(bmu), bf(wsg), fb(bsg))


@functools.partial(jax.jit, static_argnames=("output_dim", "row_tile"))
def decoder_forward(target_x, stochastic_rep, kernel_params, *,
                    output_dim, row_tile=1024):
    """target_x: [B, N, x_dim], stochastic_rep: [B, N, rep_dim]."""
    w1, b1, w2, b2, wmu, bmu, wsg, bsg = kernel_params

    B, N, x_dim = target_x.shape
    _, _, rep_dim = stochastic_rep.shape
    Din = x_dim + rep_dim
    assert Din == w1.shape[0], "input_dim + rep_dim mismatch"
    d = output_dim
    M = B * N

    # Flatten rows; bf16 halves streamed activation bytes.
    rep2d = stochastic_rep.reshape(M, rep_dim).astype(jnp.bfloat16)
    x2d = target_x.reshape(M, x_dim).astype(jnp.bfloat16)

    # Row tiling: large tiles (amortize ~0.35us/step), multiple of 16,
    # clamped for tiny problems.
    tile = min(int(row_tile), M)
    tile = max(16, ((tile + 15) // 16) * 16)
    Mp = ((M + tile - 1) // tile) * tile
    if Mp != M:
        rep2d = jnp.pad(rep2d, ((0, Mp - M), (0, 0)))
        x2d = jnp.pad(x2d, ((0, Mp - M), (0, 0)))

    grid = (Mp // tile,)
    resident = lambda a: pl.BlockSpec(a.shape, lambda i: (0, 0))  # VMEM-resident

    mu2d, sigma2d = pl.pallas_call(
        functools.partial(_decoder_kernel, rep_dim=rep_dim, x_dim=x_dim),
        out_shape=(jax.ShapeDtypeStruct((Mp, d), jnp.float32),
                   jax.ShapeDtypeStruct((Mp, d), jnp.float32)),
        grid=grid,
        in_specs=[pl.BlockSpec((tile, rep_dim), lambda i: (i, 0)),
                  pl.BlockSpec((tile, x_dim), lambda i: (i, 0)),
                  resident(w1), resident(b1), resident(w2), resident(b2),
                  resident(wmu), resident(bmu), resident(wsg), resident(bsg)],
        out_specs=(pl.BlockSpec((tile, d), lambda i: (i, 0)),
                   pl.BlockSpec((tile, d), lambda i: (i, 0))),
        scratch_shapes=[pltpu.VMEM((tile, Din), jnp.float32)],
        compiler_params=pltpu.CompilerParams(
            dimension_semantics=("parallel",),
            vmem_limit_bytes=48 * 1024 * 1024),
    )(rep2d, x2d, w1, b1, w2, b2, wmu, bmu, wsg, bsg)

    mu = mu2d[:M].reshape(B, N, d)
    sigma = sigma2d[:M].reshape(B, N, d)
    return mu, sigma


def init_decoder_params(key, input_dim, rep_dim, hidden_dim, output_dim):
    """Deterministic init mimicking torch nn.Linear (uniform +-1/sqrt(fan_in)).
    Weights stored [in, out], biases [1, out], all f32."""
    def linear(key, fan_in, fan_out):
        kw, kb = jax.random.split(key)
        bound = 1.0 / jnp.sqrt(float(fan_in))
        w = jax.random.uniform(kw, (fan_in, fan_out), jnp.float32, -bound, bound)
        b = jax.random.uniform(kb, (1, fan_out), jnp.float32, -bound, bound)
        return w, b

    d_in = input_dim + rep_dim
    k1, k2, k3, k4 = jax.random.split(key, 4)
    w1, b1 = linear(k1, d_in, hidden_dim)
    w2, b2 = linear(k2, hidden_dim, hidden_dim)
    wmu, bmu = linear(k3, hidden_dim, output_dim)
    wsg, bsg = linear(k4, hidden_dim, output_dim)
    return (w1, b1, w2, b2, wmu, bmu, wsg, bsg)


def decoder_reference(target_x, stochastic_rep, params, output_dim):
    """Pure-JAX reference matching the PyTorch forward."""
    w1, b1, w2, b2, wmu, bmu, wsg, bsg = params
    h = jnp.concatenate([stochastic_rep, target_x], axis=-1)
    B, N, Din = h.shape
    h = h.reshape(-1, Din)
    h = jnp.maximum(h @ w1 + b1, 0.0)
    h = jnp.maximum(h @ w2 + b2, 0.0)
    mu = (h @ wmu + bmu).reshape(B, N, output_dim)
    log_sigma = (h @ wsg + bsg).reshape(B, N, output_dim)
    sigma = 0.1 + 0.9 * jax.nn.softplus(log_sigma)
    return mu, sigma


if __name__ == "__main__":
    # Small, forward-consistent shapes.
    batch, num_points = 2, 8
    x_dim = 4          # "input_dim" in the module (target_x feature dim)
    rep_dim = 8
    hidden_dim = 32
    output_dim = 2

    key = jax.random.PRNGKey(0)
    kx, kr, kp = jax.random.split(key, 3)
    target_x = jax.random.normal(kx, (batch, num_points, x_dim), jnp.float32)
    stochastic_rep = jax.random.normal(kr, (batch, num_points, rep_dim), jnp.float32)
    params = init_decoder_params(kp, x_dim, rep_dim, hidden_dim, output_dim)
    kparams = prepare_decoder_params(params)

    mu, sigma = decoder_forward(target_x, stochastic_rep, kparams,
                                output_dim=output_dim)
    jax.block_until_ready((mu, sigma))

    assert mu.shape == (batch, num_points, output_dim)
    assert sigma.shape == (batch, num_points, output_dim)

    # (1) Tight check against a reference run on the same bf16-quantized
    #     inputs/weights (isolates kernel correctness from quantization).
    q = lambda a: a.astype(jnp.bfloat16).astype(jnp.float32)
    qparams = (q(params[0]), params[1], q(params[2]), params[3],
               q(params[4]), params[5], q(params[6]), params[7])
    mu_q, sigma_q = decoder_reference(q(target_x), q(stochastic_rep), qparams,
                                      output_dim)
    assert jnp.allclose(mu, mu_q, atol=2e-3, rtol=2e-3)
    assert jnp.allclose(sigma, sigma_q, atol=2e-3, rtol=2e-3)

    # (2) Loose check against the full-f32 reference (bf16 rounding tolerance).
    mu_f, sigma_f = decoder_reference(target_x, stochastic_rep, params, output_dim)
    assert jnp.allclose(mu, mu_f, atol=1e-1, rtol=1e-1)
    assert jnp.allclose(sigma, sigma_f, atol=1e-1, rtol=1e-1)

    print("KERNEL_OK")
</pallas_src>

<mosaic_0001>
module attributes {stable_mosaic.version = 11 : i64} {
  func.func @_decoder_kernel(%arg0: i32, %arg1: memref<16x8xbf16, #tpu.memory_space<vmem>>, %arg2: memref<16x4xbf16, #tpu.memory_space<vmem>>, %arg3: memref<12x32xbf16, #tpu.memory_space<vmem>>, %arg4: memref<1x32xf32, #tpu.memory_space<vmem>>, %arg5: memref<32x32xbf16, #tpu.memory_space<vmem>>, %arg6: memref<1x32xf32, #tpu.memory_space<vmem>>, %arg7: memref<32x2xbf16, #tpu.memory_space<vmem>>, %arg8: memref<1x2xf32, #tpu.memory_space<vmem>>, %arg9: memref<32x2xbf16, #tpu.memory_space<vmem>>, %arg10: memref<1x2xf32, #tpu.memory_space<vmem>>, %arg11: memref<16x2xf32, #tpu.memory_space<vmem>>, %arg12: memref<16x2xf32, #tpu.memory_space<vmem>>, %arg13: memref<16x12xf32, #tpu.memory_space<vmem>>) attributes {dimension_semantics = [#tpu.dimension_semantics<parallel>], iteration_bounds = array<i64: 1>, scalar_prefetch = 0 : i64, scratch_operands = 1 : i64, tpu.core_type = #tpu.core_type<tc>, window_params = [{transform_indices = @transform_0, window_bounds = array<i64: 16, 8>}, {transform_indices = @transform_1, window_bounds = array<i64: 16, 4>}, {pipeline_mode = #tpu.pipeline_mode<synchronous>, transform_indices = @transform_2, window_bounds = array<i64: 12, 32>}, {pipeline_mode = #tpu.pipeline_mode<synchronous>, transform_indices = @transform_3, window_bounds = array<i64: 1, 32>}, {pipeline_mode = #tpu.pipeline_mode<synchronous>, transform_indices = @transform_4, window_bounds = array<i64: 32, 32>}, {pipeline_mode = #tpu.pipeline_mode<synchronous>, transform_indices = @transform_5, window_bounds = array<i64: 1, 32>}, {pipeline_mode = #tpu.pipeline_mode<synchronous>, transform_indices = @transform_6, window_bounds = array<i64: 32, 2>}, {pipeline_mode = #tpu.pipeline_mode<synchronous>, transform_indices = @transform_7, window_bounds = array<i64: 1, 2>}, {pipeline_mode = #tpu.pipeline_mode<synchronous>, transform_indices = @transform_8, window_bounds = array<i64: 32, 2>}, {pipeline_mode = #tpu.pipeline_mode<synchronous>, transform_indices = @transform_9, window_bounds = array<i64: 1, 2>}, {transform_indices = @transform_10, window_bounds = array<i64: 16, 2>}, {transform_indices = @transform_11, window_bounds = array<i64: 16, 2>}]} {
    %c0 = arith.constant 0 : index
    %c0_0 = arith.constant 0 : index
    %0 = vector.load %arg1[%c0, %c0_0] : memref<16x8xbf16, #tpu.memory_space<vmem>>, vector<16x8xbf16>
    %1 = arith.extf %0 : vector<16x8xbf16> to vector<16x8xf32>
    %c0_1 = arith.constant 0 : index
    %c0_2 = arith.constant 0 : index
    %2 = vector.load %arg13[%c0_1, %c0_2] : memref<16x12xf32, #tpu.memory_space<vmem>>, vector<16x8xf32>
    tpu.vector_store %arg13[%c0_1, %c0_2], %1 {strides = array<i32>} : memref<16x12xf32, #tpu.memory_space<vmem>>, vector<16x8xf32>,
    %c0_3 = arith.constant 0 : index
    %c0_4 = arith.constant 0 : index
    %3 = vector.load %arg2[%c0_3, %c0_4] : memref<16x4xbf16, #tpu.memory_space<vmem>>, vector<16x4xbf16>
    %4 = arith.extf %3 : vector<16x4xbf16> to vector<16x4xf32>
    %c0_5 = arith.constant 0 : index
    %c8 = arith.constant 8 : index
    %5 = vector.load %arg13[%c0_5, %c8] : memref<16x12xf32, #tpu.memory_space<vmem>>, vector<16x4xf32>
    tpu.vector_store %arg13[%c0_5, %c8], %4 {strides = array<i32>} : memref<16x12xf32, #tpu.memory_space<vmem>>, vector<16x4xf32>,
    %c0_6 = arith.constant 0 : index
    %c0_7 = arith.constant 0 : index
    %6 = vector.load %arg13[%c0_6, %c0_7] : memref<16x12xf32, #tpu.memory_space<vmem>>, vector<16x12xf32>
    %7 = arith.truncf %6 : vector<16x12xf32> to vector<16x12xbf16>
    %c0_8 = arith.constant 0 : index
    %c0_9 = arith.constant 0 : index
    %8 = vector.load %arg3[%c0_8, %c0_9] : memref<12x32xbf16, #tpu.memory_space<vmem>>, vector<12x32xbf16>
    %cst = arith.constant dense<0.000000e+00> : vector<16x32xf32>
    %9 = tpu.matmul %7, %8, %cst {dimension_numbers = #tpu.dot_dimension_numbers<[1], [0], [0], [1], [0, 0, 1, 1], [], []>} : vector<16x12xbf16>, vector<12x32xbf16>, vector<16x32xf32> -> vector<16x32xf32>
    %c0_10 = arith.constant 0 : index
    %c0_11 = arith.constant 0 : index
    %10 = vector.load %arg4[%c0_10, %c0_11] : memref<1x32xf32, #tpu.memory_space<vmem>>, vector<1x32xf32>
    %11 = vector.broadcast %10 : vector<1x32xf32> to vector<16x32xf32>
    %12 = arith.addf %9, %11 : vector<16x32xf32>
    %cst_12 = arith.constant 0.000000e+00 : f32
    %13 = vector.broadcast %cst_12 : f32 to vector<16x32xf32>
    %14 = arith.maximumf %12, %13 : vector<16x32xf32>
    %15 = arith.truncf %14 : vector<16x32xf32> to vector<16x32xbf16>
    %c0_13 = arith.constant 0 : index
    %c0_14 = arith.constant 0 : index
    %16 = vector.load %arg5[%c0_13, %c0_14] : memref<32x32xbf16, #tpu.memory_space<vmem>>, vector<32x32xbf16>
    %cst_15 = arith.constant dense<0.000000e+00> : vector<16x32xf32>
    %17 = tpu.matmul %15, %16, %cst_15 {dimension_numbers = #tpu.dot_dimension_numbers<[1], [0], [0], [1], [0, 0, 1, 1], [], []>} : vector<16x32xbf16>, vector<32x32xbf16>, vector<16x32xf32> -> vector<16x32xf32>
    %c0_16 = arith.constant 0 : index
    %c0_17 = arith.constant 0 : index
    %18 = vector.load %arg6[%c0_16, %c0_17] : memref<1x32xf32, #tpu.memory_space<vmem>>, vector<1x32xf32>
    %19 = vector.broadcast %18 : vector<1x32xf32> to vector<16x32xf32>
    %20 = arith.addf %17, %19 : vector<16x32xf32>
    %cst_18 = arith.constant 0.000000e+00 : f32
    %21 = vector.broadcast %cst_18 : f32 to vector<16x32xf32>
    %22 = arith.maximumf %20, %21 : vector<16x32xf32>
    %23 = arith.truncf %22 : vector<16x32xf32> to vector<16x32xbf16>
    %c0_19 = arith.constant 0 : index
    %c0_20 = arith.constant 0 : index
    %24 = vector.load %arg7[%c0_19, %c0_20] : memref<32x2xbf16, #tpu.memory_space<vmem>>, vector<32x2xbf16>
    %cst_21 = arith.constant dense<0.000000e+00> : vector<16x2xf32>
    %25 = tpu.matmul %23, %24, %cst_21 {dimension_numbers = #tpu.dot_dimension_numbers<[1], [0], [0], [1], [0, 0, 1, 1], [], []>} : vector<16x32xbf16>, vector<32x2xbf16>, vector<16x2xf32> -> vector<16x2xf32>
    %c0_22 = arith.constant 0 : index
    %c0_23 = arith.constant 0 : index
    %26 = vector.load %arg8[%c0_22, %c0_23] : memref<1x2xf32, #tpu.memory_space<vmem>>, vector<1x2xf32>
    %27 = vector.broadcast %26 : vector<1x2xf32> to vector<16x2xf32>
    %28 = arith.addf %25, %27 : vector<16x2xf32>
    %c0_24 = arith.constant 0 : index
    %c0_25 = arith.constant 0 : index
    %29 = vector.load %arg9[%c0_24, %c0_25] : memref<32x2xbf16, #tpu.memory_space<vmem>>, vector<32x2xbf16>
    %cst_26 = arith.constant dense<0.000000e+00> : vector<16x2xf32>
    %30 = tpu.matmul %23, %29, %cst_26 {dimension_numbers = #tpu.dot_dimension_numbers<[1], [0], [0], [1], [0, 0, 1, 1], [], []>} : vector<16x32xbf16>, vector<32x2xbf16>, vector<16x2xf32> -> vector<16x2xf32>
    %c0_27 = arith.constant 0 : index
    %c0_28 = arith.constant 0 : index
    %31 = vector.load %arg10[%c0_27, %c0_28] : memref<1x2xf32, #tpu.memory_space<vmem>>, vector<1x2xf32>
    %32 = vector.broadcast %31 : vector<1x2xf32> to vector<16x2xf32>
    %33 = arith.addf %30, %32 : vector<16x2xf32>
    %c0_29 = arith.constant 0 : index
    %c0_30 = arith.constant 0 : index
    %34 = vector.load %arg11[%c0_29, %c0_30] : memref<16x2xf32, #tpu.memory_space<vmem>>, vector<16x2xf32>
    tpu.vector_store %arg11[%c0_29, %c0_30], %28 {strides = array<i32>} : memref<16x2xf32, #tpu.memory_space<vmem>>, vector<16x2xf32>,
    %cst_31 = arith.constant 0.000000e+00 : f32
    %35 = vector.broadcast %cst_31 : f32 to vector<16x2xf32>
    %36 = arith.maximumf %33, %35 : vector<16x2xf32>
    %37 = vector.broadcast %cst_31 : f32 to vector<16x2xf32>
    %38 = arith.subf %33, %37 : vector<16x2xf32>
    %39 = arith.cmpf one, %38, %38 : vector<16x2xf32>
    %40 = vector.broadcast %cst_31 : f32 to vector<16x2xf32>
    %41 = arith.addf %33, %40 : vector<16x2xf32>
    %42 = math.absf %38 : vector<16x2xf32>
    %cst_32 = arith.constant 0.000000e+00 : f32
    %43 = vector.broadcast %cst_32 : f32 to vector<16x2xf32>
    %44 = arith.subf %43, %42 : vector<16x2xf32>
    %45 = math.exp %44 : vector<16x2xf32>
    %46 = math.log1p %45 : vector<16x2xf32>
    %47 = arith.addf %36, %46 : vector<16x2xf32>
    %48 = arith.select %39, %41, %47 : vector<16x2xi1>, vector<16x2xf32>
    %cst_33 = arith.constant 0.899999976 : f32
    %49 = vector.broadcast %cst_33 : f32 to vector<16x2xf32>
    %50 = arith.mulf %49, %48 : vector<16x2xf32>
    %cst_34 = arith.constant 1.000000e-01 : f32
    %51 = vector.broadcast %cst_34 : f32 to vector<16x2xf32>
    %52 = arith.addf %51, %50 : vector<16x2xf32>
    %c0_35 = arith.constant 0 : index
    %c0_36 = arith.constant 0 : index
    %53 = vector.load %arg12[%c0_35, %c0_36] : memref<16x2xf32, #tpu.memory_space<vmem>>, vector<16x2xf32>
    tpu.vector_store %arg12[%c0_35, %c0_36], %52 {strides = array<i32>} : memref<16x2xf32, #tpu.memory_space<vmem>>, vector<16x2xf32>,
    return
  }
  func.func @transform_0(%arg0: i32) -> (i32, i32) {
    %c0_i32 = arith.constant 0 : i32
    %c0_i32_0 = arith.constant 0 : i32
    return %arg0, %c0_i32 : i32, i32
  }
  func.func @transform_1(%arg0: i32) -> (i32, i32) {
    %c0_i32 = arith.constant 0 : i32
    %c0_i32_0 = arith.constant 0 : i32
    return %arg0, %c0_i32 : i32, i32
  }
  func.func @transform_2(%arg0: i32) -> (i32, i32) {
    %c0_i32 = arith.constant 0 : i32
    %c0_i32_0 = arith.constant 0 : i32
    %c0_i32_1 = arith.constant 0 : i32
    return %c0_i32, %c0_i32_0 : i32, i32
  }
  func.func @transform_3(%arg0: i32) -> (i32, i32) {
    %c0_i32 = arith.constant 0 : i32
    %c0_i32_0 = arith.constant 0 : i32
    %c0_i32_1 = arith.constant 0 : i32
    return %c0_i32, %c0_i32_0 : i32, i32
  }
  func.func @transform_4(%arg0: i32) -> (i32, i32) {
    %c0_i32 = arith.constant 0 : i32
    %c0_i32_0 = arith.constant 0 : i32
    %c0_i32_1 = arith.constant 0 : i32
    return %c0_i32, %c0_i32_0 : i32, i32
  }
  func.func @transform_5(%arg0: i32) -> (i32, i32) {
    %c0_i32 = arith.constant 0 : i32
    %c0_i32_0 = arith.constant 0 : i32
    %c0_i32_1 = arith.constant 0 : i32
    return %c0_i32, %c0_i32_0 : i32, i32
  }
  func.func @transform_6(%arg0: i32) -> (i32, i32) {
    %c0_i32 = arith.constant 0 : i32
    %c0_i32_0 = arith.constant 0 : i32
    %c0_i32_1 = arith.constant 0 : i32
    return %c0_i32, %c0_i32_0 : i32, i32
  }
  func.func @transform_7(%arg0: i32) -> (i32, i32) {
    %c0_i32 = arith.constant 0 : i32
    %c0_i32_0 = arith.constant 0 : i32
    %c0_i32_1 = arith.constant 0 : i32
    return %c0_i32, %c0_i32_0 : i32, i32
  }
  func.func @transform_8(%arg0: i32) -> (i32, i32) {
    %c0_i32 = arith.constant 0 : i32
    %c0_i32_0 = arith.constant 0 : i32
    %c0_i32_1 = arith.constant 0 : i32
    return %c0_i32, %c0_i32_0 : i32, i32
  }
  func.func @transform_9(%arg0: i32) -> (i32, i32) {
    %c0_i32 = arith.constant 0 : i32
    %c0_i32_0 = arith.constant 0 : i32
    %c0_i32_1 = arith.constant 0 : i32
    return %c0_i32, %c0_i32_0 : i32, i32
  }
  func.func @transform_10(%arg0: i32) -> (i32, i32) {
    %c0_i32 = arith.constant 0 : i32
    %c0_i32_0 = arith.constant 0 : i32
    return %arg0, %c0_i32 : i32, i32
  }
  func.func @transform_11(%arg0: i32) -> (i32, i32) {
    %c0_i32 = arith.constant 0 : i32
    %c0_i32_0 = arith.constant 0 : i32
    return %arg0, %c0_i32 : i32, i32
  }
}

</mosaic_0001>

<llo_original>
// kernel: decoder_forward.1
$region0: #{decoder_forward.1}
  #allocation0 [shape = 'u32[]', space=smem, size = 0x4, offset = 0x4, fixed_abs, tag = 'smem constant byte address 0x4 - core index']
  #allocation1 [shape = 'u32[144,128]{1,0:T(1,128)}', space=vmem, size = 0x12000, scoped, tag = 'internal scratch']
  #allocation2 [shape = 'f32[16,12]{1,0:T(8,128)}', space=vmem, size = 0x2000, scoped, tag = 'scratch operand']
  %s0 = inlined_call_operand.vmem [shape: bf16[16,8], index: 0, kind: input, shape index: {}]
  %s1 = inlined_call_operand.vmem [shape: bf16[16,4], index: 1, kind: input, shape index: {}]
  %s2 = inlined_call_operand.vmem [shape: bf16[12,32], index: 2, kind: input, shape index: {}]
  %s3 = inlined_call_operand.vmem [shape: f32[1,32], index: 3, kind: input, shape index: {}]
  %s4 = inlined_call_operand.vmem [shape: bf16[32,32], index: 4, kind: input, shape index: {}]
  %s5 = inlined_call_operand.vmem [shape: f32[1,32], index: 5, kind: input, shape index: {}]
  %s6 = inlined_call_operand.vmem [shape: bf16[32,2], index: 6, kind: input, shape index: {}]
  %s7 = inlined_call_operand.vmem [shape: f32[1,2], index: 7, kind: input, shape index: {}]
  %s8 = inlined_call_operand.vmem [shape: bf16[32,2], index: 8, kind: input, shape index: {}]
  %s9 = inlined_call_operand.vmem [shape: f32[1,2], index: 9, kind: input, shape index: {}]
  %s10 = inlined_call_operand.vmem [shape: f32[16,2], index: 10, kind: output, shape index: {0}]
  %s11 = inlined_call_operand.vmem [shape: f32[16,2], index: 11, kind: output, shape index: {1}]
  %12 = xla_tuple %s10, %s11
  %s13 = sld [smem:[#allocation0]]
  $region58: #{decoder_forward.1} parent=0
    _
  %s15 = ssub.s32 1, %s13
  %s16 = scalar_select 0, %s15, %s13
  // Predicated region
  $region2: #{decoder_forward.1} parent=0 // pred_check
    _
  $region3: #{decoder_forward.1} parent=0 // pred_check_branch
    %18 = sbr.rel (0) target = $region5
  $region4: #{decoder_forward.1} parent=0 // pred_region
    _
  $region5: #{decoder_forward.1} parent=0 // pred_fallthru
    _
  // Predicated region
  $region6: #{decoder_forward.1} parent=0 // pred_check
    _
  $region7: #{decoder_forward.1} parent=0 // pred_check_branch
    %20 = sbr.rel (0) target = $region9
  $region8: #{decoder_forward.1} parent=0 // pred_region
    _
  $region9: #{decoder_forward.1} parent=0 // pred_fallthru
    _
  // Predicated region
  $region10: #{decoder_forward.1} parent=0 // pred_check
    _
  $region11: #{decoder_forward.1} parent=0 // pred_check_branch
    %22 = sbr.rel (0) target = $region13
  $region12: #{decoder_forward.1} parent=0 // pred_region
    _
  $region13: #{decoder_forward.1} parent=0 // pred_fallthru
    _
  // Predicated region
  $region14: #{decoder_forward.1} parent=0 // pred_check
    _
  $region15: #{decoder_forward.1} parent=0 // pred_check_branch
    %24 = sbr.rel (0) target = $region17
  $region16: #{decoder_forward.1} parent=0 // pred_region
    _
  $region17: #{decoder_forward.1} parent=0 // pred_fallthru
    _
  // Predicated region
  $region18: #{decoder_forward.1} parent=0 // pred_check
    _
  $region19: #{decoder_forward.1} parent=0 // pred_check_branch
    %26 = sbr.rel (0) target = $region21
  $region20: #{decoder_forward.1} parent=0 // pred_region
    _
  $region21: #{decoder_forward.1} parent=0 // pred_fallthru
    _
  // Predicated region
  $region22: #{decoder_forward.1} parent=0 // pred_check
    _
  $region23: #{decoder_forward.1} parent=0 // pred_check_branch
    %28 = sbr.rel (0) target = $region25
  $region24: #{decoder_forward.1} parent=0 // pred_region
    _
  $region25: #{decoder_forward.1} parent=0 // pred_fallthru
    _
  // Predicated region
  $region26: #{decoder_forward.1} parent=0 // pred_check
    _
  $region27: #{decoder_forward.1} parent=0 // pred_check_branch
    %30 = sbr.rel (0) target = $region29
  $region28: #{decoder_forward.1} parent=0 // pred_region
    _
  $region29: #{decoder_forward.1} parent=0 // pred_fallthru
    _
  // Predicated region
  $region30: #{decoder_forward.1} parent=0 // pred_check
    _
  $region31: #{decoder_forward.1} parent=0 // pred_check_branch
    %32 = sbr.rel (0) target = $region33
  $region32: #{decoder_forward.1} parent=0 // pred_region
    _
  $region33: #{decoder_forward.1} parent=0 // pred_fallthru
    _
  // Predicated region
  $region34: #{decoder_forward.1} parent=0 // pred_check
    _
  $region35: #{decoder_forward.1} parent=0 // pred_check_branch
    %34 = sbr.rel (0) target = $region37
  $region36: #{decoder_forward.1} parent=0 // pred_region
    _
  $region37: #{decoder_forward.1} parent=0 // pred_fallthru
    _
  // Predicated region
  $region38: #{decoder_forward.1} parent=0 // pred_check
    _
  $region39: #{decoder_forward.1} parent=0 // pred_check_branch
    %36 = sbr.rel (0) target = $region41
  $region40: #{decoder_forward.1} parent=0 // pred_region
    _
  $region41: #{decoder_forward.1} parent=0 // pred_fallthru
    _
  %v38 = vld [vmem:[%s0] sm:$0xf]
  %v39 = vld [vmem:[%s0 + $0x4] sm:$0xf]
  %v40 = vunpack.c.l.bf16 %v38
  %v41 = vunpack.c.l.bf16 %v39
  %vm42 = vcmask 64512
  %43 = vst.msk [vmem:[#allocation2] sm:$0xff] %vm42, %v40
  %44 = vst.msk [vmem:[#allocation2 + $0x8] sm:$0xff] %vm42, %v41
  %v45 = vld [vmem:[%s1] sm:$0xf]
  %v46 = vld [vmem:[%s1 + $0x4] sm:$0xf]
  %v47 = vunpack.c.l.bf16 %v45
  %v48 = vunpack.c.l.bf16 %v46
  %51 = vrot.lane.b32.xlu0 %v47, 8
  %v52 = vpop.permute.xlu0 %51
  %53 = vrot.lane.b32.xlu0 %v48, 8
  %v54 = vpop.permute.xlu0 %53
  %vm57 = vcmask 97344
  %58 = vst.msk [vmem:[#allocation2] sm:$0xff] %vm57, %v52
  %59 = vst.msk [vmem:[#allocation2 + $0x8] sm:$0xff] %vm57, %v54
  %v60 = vld [vmem:[#allocation2] sm:$0xff]
  %v61 = vld [vmem:[#allocation2 + $0x8] sm:$0xff]
  %v62 = vpack.c.bf16 %v61, %v60
  %v63 = vld [vmem:[%s2] sm:$0xf]
  %v64 = vld [vmem:[%s2 + $0x4] sm:$0x3]
  %v65 = vld [vmem:[%s3] sm:$0x1]
  %v67 = vlaneseq
  %v68 = vshrl.u32 %v67, 7
  %v69 = vsub.s32 0, %v68
  %v70 = vrot.slane %v65, %v69
  %v74 = vunpack.c.l.b16 %v63
  %v75 = vunpack.c.l.b16 %v64
  %v76 = vpack.c.b16 %v75, %v74
  %vm77 = vcmask 97280
  %v79 = vsel %vm77, %v62, 0
  %vm81 = vcmask 1045504
  %v83 = vsel %vm81, %v76, 0
  %85 = vmatprep.subr.bf16.mxu0 0
  %86 = vmatpush1.bf16.msra.mxu0 %v83
  %87 = vmatprep.subr.bf16.mxu0 0
  %88 = vmatpush1.bf16.msra.mxu0 0
  %89 = vmatprep.subr.bf16.mxu0 0
  %90 = vmatpush1.bf16.msra.mxu0 0
  %91 = vmatprep.subr.bf16.mxu0 0
  %92 = vmatpush1.bf16.msra.mxu0 0
  %93 = vmatprep.subr.bf16.mxu0 0
  %94 = vmatpush1.bf16.msra.mxu0 0
  %95 = vmatprep.subr.bf16.mxu0 0
  %96 = vmatpush1.bf16.msra.mxu0 0
  %97 = vmatprep.subr.bf16.mxu0 0
  %98 = vmatpush1.bf16.msra.mxu0 0
  %99 = vmatprep.subr.bf16.mxu0 0
  %100 = vmatpush1.bf16.msra.mxu0 0
  %101 = vmatprep.subr.bf16.mxu0 0
  %102 = vmatpush1.bf16.msra.mxu0 0
  %103 = vmatprep.subr.bf16.mxu0 0
  %104 = vmatpush1.bf16.msra.mxu0 0
  %105 = vmatprep.subr.bf16.mxu0 0
  %106 = vmatpush1.bf16.msra.mxu0 0
  %107 = vmatprep.subr.bf16.mxu0 0
  %108 = vmatpush1.bf16.msra.mxu0 0
  %109 = vmatprep.subr.bf16.mxu0 0
  %110 = vmatpush1.bf16.msra.mxu0 0
  %111 = vmatprep.subr.bf16.mxu0 0
  %112 = vmatpush1.bf16.msra.mxu0 0
  %113 = vmatprep.subr.bf16.mxu0 0
  %114 = vmatpush1.bf16.msra.mxu0 0
  %115 = vmatprep.subr.bf16.mxu0 0
  %116 = vmatpush1.bf16.msra.mxu0 0
  %117 = vmatprep.mubr.bf16.mxu0 0
  %118 = vmatmul.mubr.bf16.gmra.mrb[0].mxu0 %v79
  %v119 = vpop.f32.mrb[0].mxu0
  %v120 = vadd.f32 %v70, %v119
  %v121 = vpop.f32.mrb[0].mxu0
  %v122 = vpop.f32.mrb[0].mxu0
  %v123 = vadd.f32 %v70, %v122
  %v124 = vpop.f32.mrb[0].mxu0
  %125 = vdwg.mxu0
  %v126 = vmax.f32 %v120, 0.0
  %v127 = vmax.f32 %v123, 0.0
  %v128 = vpack.c.bf16 %v127, %v126
  %v129 = vld [vmem:[%s4] sm:$0xf]
  %v130 = vld [vmem:[%s4 + $0x4] sm:$0xf]
  %v131 = vld [vmem:[%s4 + $0x8] sm:$0xf]
  %v132 = vld [vmem:[%s4 + $0xc] sm:$0xf]
  %v133 = vld [vmem:[%s5] sm:$0x1]
  %v135 = vlaneseq
  %v136 = vshrl.u32 %v135, 7
  %v137 = vsub.s32 0, %v136
  %v138 = vrot.slane %v133, %v137
  %v144 = vunpack.c.l.b16 %v129
  %v145 = vunpack.c.l.b16 %v130
  %v146 = vunpack.c.l.b16 %v131
  %v147 = vunpack.c.l.b16 %v132
  %v148 = vpack.c.b16 %v145, %v144
  %v149 = vpack.c.b16 %v147, %v146
  %vm152 = vcmask 261120
  %v154 = vsel %vm152, %v128, 0
  %156 = vmatprep.subr.bf16.mxu0 0
  %157 = vmatpush1.bf16.msra.mxu0 %v148
  %158 = vmatprep.subr.bf16.mxu0 0
  %159 = vmatpush1.bf16.msra.mxu0 %v149
  %160 = vmatprep.subr.bf16.mxu0 0
  %161 = vmatpush1.bf16.msra.mxu0 0
  %162 = vmatprep.subr.bf16.mxu0 0
  %163 = vmatpush1.bf16.msra.mxu0 0
  %164 = vmatprep.subr.bf16.mxu0 0
  %165 = vmatpush1.bf16.msra.mxu0 0
  %166 = vmatprep.subr.bf16.mxu0 0
  %167 = vmatpush1.bf16.msra.mxu0 0
  %168 = vmatprep.subr.bf16.mxu0 0
  %169 = vmatpush1.bf16.msra.mxu0 0
  %170 = vmatprep.subr.bf16.mxu0 0
  %171 = vmatpush1.bf16.msra.mxu0 0
  %172 = vmatprep.subr.bf16.mxu0 0
  %173 = vmatpush1.bf16.msra.mxu0 0
  %174 = vmatprep.subr.bf16.mxu0 0
  %175 = vmatpush1.bf16.msra.mxu0 0
  %176 = vmatprep.subr.bf16.mxu0 0
  %177 = vmatpush1.bf16.msra.mxu0 0
  %178 = vmatprep.subr.bf16.mxu0 0
  %179 = vmatpush1.bf16.msra.mxu0 0
  %180 = vmatprep.subr.bf16.mxu0 0
  %181 = vmatpush1.bf16.msra.mxu0 0
  %182 = vmatprep.subr.bf16.mxu0 0
  %183 = vmatpush1.bf16.msra.mxu0 0
  %184 = vmatprep.subr.bf16.mxu0 0
  %185 = vmatpush1.bf16.msra.mxu0 0
  %186 = vmatprep.subr.bf16.mxu0 0
  %187 = vmatpush1.bf16.msra.mxu0 0
  %188 = vmatprep.mubr.bf16.mxu0 0
  %189 = vmatmul.mubr.bf16.gmra.mrb[0].mxu0 %v154
  %v190 = vpop.f32.mrb[0].mxu0
  %v191 = vadd.f32 %v138, %v190
  %v192 = vpop.f32.mrb[0].mxu0
  %v193 = vpop.f32.mrb[0].mxu0
  %v194 = vadd.f32 %v138, %v193
  %v195 = vpop.f32.mrb[0].mxu0
  %196 = vdwg.mxu0
  %v197 = vmax.f32 %v191, 0.0
  %v198 = vmax.f32 %v194, 0.0
  %v199 = vpack.c.bf16 %v198, %v197
  %v200 = vld [vmem:[%s6] sm:$0xf]
  %v201 = vld [vmem:[%s6 + $0x4] sm:$0xf]
  %v202 = vld [vmem:[%s6 + $0x8] sm:$0xf]
  %v203 = vld [vmem:[%s6 + $0xc] sm:$0xf]
  %v204 = vld [vmem:[%s7] sm:$0x1]
  %v206 = vlaneseq
  %v207 = vshrl.u32 %v206, 7
  %v208 = vsub.s32 0, %v207
  %v209 = vrot.slane %v204, %v208
  %v215 = vunpack.c.l.b16 %v200
  %v216 = vunpack.c.l.b16 %v201
  %v217 = vunpack.c.l.b16 %v202
  %v218 = vunpack.c.l.b16 %v203
  %v219 = vpack.c.b16 %v216, %v215
  %v220 = vpack.c.b16 %v218, %v217
  %v224 = vsel %vm152, %v199, 0
  %226 = vmatprep.subr.bf16.mxu0 0
  %227 = vmatpush1.bf16.msra.mxu0 %v219
  %228 = vmatprep.subr.bf16.mxu0 0
  %229 = vmatpush1.bf16.msra.mxu0 %v220
  %230 = vmatprep.subr.bf16.mxu0 0
  %231 = vmatpush1.bf16.msra.mxu0 0
  %232 = vmatprep.subr.bf16.mxu0 0
  %233 = vmatpush1.bf16.msra.mxu0 0
  %234 = vmatprep.subr.bf16.mxu0 0
  %235 = vmatpush1.bf16.msra.mxu0 0
  %236 = vmatprep.subr.bf16.mxu0 0
  %237 = vmatpush1.bf16.msra.mxu0 0
  %238 = vmatprep.subr.bf16.mxu0 0
  %239 = vmatpush1.bf16.msra.mxu0 0
  %240 = vmatprep.subr.bf16.mxu0 0
  %241 = vmatpush1.bf16.msra.mxu0 0
  %242 = vmatprep.subr.bf16.mxu0 0
  %243 = vmatpush1.bf16.msra.mxu0 0
  %244 = vmatprep.subr.bf16.mxu0 0
  %245 = vmatpush1.bf16.msra.mxu0 0
  %246 = vmatprep.subr.bf16.mxu0 0
  %247 = vmatpush1.bf16.msra.mxu0 0
  %248 = vmatprep.subr.bf16.mxu0 0
  %249 = vmatpush1.bf16.msra.mxu0 0
  %250 = vmatprep.subr.bf16.mxu0 0
  %251 = vmatpush1.bf16.msra.mxu0 0
  %252 = vmatprep.subr.bf16.mxu0 0
  %253 = vmatpush1.bf16.msra.mxu0 0
  %254 = vmatprep.subr.bf16.mxu0 0
  %255 = vmatpush1.bf16.msra.mxu0 0
  %256 = vmatprep.subr.bf16.mxu0 0
  %257 = vmatpush1.bf16.msra.mxu0 0
  %258 = vmatprep.mubr.bf16.mxu0 0
  %259 = vmatmul.mubr.bf16.gmra.mrb[0].mxu0 %v224
  %v260 = vpop.f32.mrb[0].mxu0
  %v261 = vadd.f32 %v209, %v260
  %v262 = vpop.f32.mrb[0].mxu0
  %v263 = vpop.f32.mrb[0].mxu0
  %v264 = vadd.f32 %v209, %v263
  %v265 = vpop.f32.mrb[0].mxu0
  %266 = vdwg.mxu0
  %v267 = vld [vmem:[%s8] sm:$0xf]
  %v268 = vld [vmem:[%s8 + $0x4] sm:$0xf]
  %v269 = vld [vmem:[%s8 + $0x8] sm:$0xf]
  %v270 = vld [vmem:[%s8 + $0xc] sm:$0xf]
  %v271 = vld [vmem:[%s9] sm:$0x1]
  %v273 = vlaneseq
  %v274 = vshrl.u32 %v273, 7
  %v275 = vsub.s32 0, %v274
  %v276 = vrot.slane %v271, %v275
  %v282 = vunpack.c.l.b16 %v267
  %v283 = vunpack.c.l.b16 %v268
  %v284 = vunpack.c.l.b16 %v269
  %v285 = vunpack.c.l.b16 %v270
  %v286 = vpack.c.b16 %v283, %v282
  %v287 = vpack.c.b16 %v285, %v284
  %290 = vmatprep.subr.bf16.mxu0 0
  %291 = vmatpush1.bf16.msra.mxu0 %v286
  %292 = vmatprep.subr.bf16.mxu0 0
  %293 = vmatpush1.bf16.msra.mxu0 %v287
  %294 = vmatprep.subr.bf16.mxu0 0
  %295 = vmatpush1.bf16.msra.mxu0 0
  %296 = vmatprep.subr.bf16.mxu0 0
  %297 = vmatpush1.bf16.msra.mxu0 0
  %298 = vmatprep.subr.bf16.mxu0 0
  %299 = vmatpush1.bf16.msra.mxu0 0
  %300 = vmatprep.subr.bf16.mxu0 0
  %301 = vmatpush1.bf16.msra.mxu0 0
  %302 = vmatprep.subr.bf16.mxu0 0
  %303 = vmatpush1.bf16.msra.mxu0 0
  %304 = vmatprep.subr.bf16.mxu0 0
  %305 = vmatpush1.bf16.msra.mxu0 0
  %306 = vmatprep.subr.bf16.mxu0 0
  %307 = vmatpush1.bf16.msra.mxu0 0
  %308 = vmatprep.subr.bf16.mxu0 0
  %309 = vmatpush1.bf16.msra.mxu0 0
  %310 = vmatprep.subr.bf16.mxu0 0
  %311 = vmatpush1.bf16.msra.mxu0 0
  %312 = vmatprep.subr.bf16.mxu0 0
  %313 = vmatpush1.bf16.msra.mxu0 0
  %314 = vmatprep.subr.bf16.mxu0 0
  %315 = vmatpush1.bf16.msra.mxu0 0
  %316 = vmatprep.subr.bf16.mxu0 0
  %317 = vmatpush1.bf16.msra.mxu0 0
  %318 = vmatprep.subr.bf16.mxu0 0
  %319 = vmatpush1.bf16.msra.mxu0 0
  %320 = vmatprep.subr.bf16.mxu0 0
  %321 = vmatpush1.bf16.msra.mxu0 0
  %322 = vmatprep.mubr.bf16.mxu0 0
  %323 = vmatmul.mubr.bf16.gmra.mrb[0].mxu0 %v224
  %v324 = vpop.f32.mrb[0].mxu0
  %v325 = vadd.f32 %v276, %v324
  %v326 = vpop.f32.mrb[0].mxu0
  %v327 = vpop.f32.mrb[0].mxu0
  %v328 = vadd.f32 %v276, %v327
  %v329 = vpop.f32.mrb[0].mxu0
  %330 = vdwg.mxu0
  %vm331 = vcmask 15360
  %332 = vst.msk [vmem:[%s10] sm:$0xff] %vm331, %v261
  %333 = vst.msk [vmem:[%s10 + $0x8] sm:$0xff] %vm331, %v264
  %v334 = vmax.f32 %v325, 0.0
  %v335 = vmax.f32 %v328, 0.0
  %vm336 = vcmp.ne.f32.partialorder %v325, %v325
  %vm337 = vcmp.ne.f32.partialorder %v328, %v328
  %v338 = vadd.f32 %v325, 0.0
  %v339 = vadd.f32 %v328, 0.0
  %v340 = vand.u32 2147483647, %v325
  %v341 = vand.u32 2147483647, %v328
  %v342 = vsub.f32 0.0, %v340
  %v343 = vsub.f32 0.0, %v341
  %v344 = vmul.f32 %v342, 1.442695
  %v345 = vpow.pop %v344
  %v346 = vmul.f32 %v343, 1.442695
  %v347 = vpow.pop %v346
  %v348 = vadd.f32 %v345, 1.0
  %v349 = vlog2.pop %v348
  %v350 = vmul.f32 %v349, 0.6931472
  %v351 = vmul.f32 -0.5, %v345
  %v352 = vadd.f32 %v351, 1.0
  %v353 = vmul.f32 %v352, %v345
  %v354 = vand.u32 2147483647, %v345
  %vm355 = vcmp.lt.f32.partialorder %v354, 0.0004427343
  %v356 = vsel %vm355, %v353, %v350
  %v357 = vadd.f32 %v347, 1.0
  %v358 = vlog2.pop %v357
  %v359 = vmul.f32 %v358, 0.6931472
  %v360 = vmul.f32 -0.5, %v347
  %v361 = vadd.f32 %v360, 1.0
  %v362 = vmul.f32 %v361, %v347
  %v363 = vand.u32 2147483647, %v347
  %vm364 = vcmp.lt.f32.partialorder %v363, 0.0004427343
  %v365 = vsel %vm364, %v362, %v359
  %v366 = vadd.f32 %v334, %v356
  %v367 = vadd.f32 %v335, %v365
  %v368 = vsel %vm336, %v338, %v366
  %v369 = vsel %vm337, %v339, %v367
  %v370 = vmul.f32 %v368, 0.9
  %v371 = vmul.f32 %v369, 0.9
  %v372 = vadd.f32 %v370, 0.1
  %v373 = vadd.f32 %v371, 0.1
  %374 = vst.msk [vmem:[%s11] sm:$0xff] %vm331, %v372
  %375 = vst.msk [vmem:[%s11 + $0x8] sm:$0xff] %vm331, %v373
  // Predicated region
  $region42: #{decoder_forward.1} parent=0 // pred_check
    _
  $region43: #{decoder_forward.1} parent=0 // pred_check_branch
    %377 = sbr.rel (0) target = $region45
  $region44: #{decoder_forward.1} parent=0 // pred_region
    _
  $region45: #{decoder_forward.1} parent=0 // pred_fallthru
    _
  // Predicated region
  $region46: #{decoder_forward.1} parent=0 // pred_check
    _
  $region47: #{decoder_forward.1} parent=0 // pred_check_branch
    %379 = sbr.rel (0) target = $region49
  $region48: #{decoder_forward.1} parent=0 // pred_region
    _
  $region49: #{decoder_forward.1} parent=0 // pred_fallthru
    _
  // Predicated region
  $region50: #{decoder_forward.1} parent=0 // pred_check
    _
  $region51: #{decoder_forward.1} parent=0 // pred_check_branch
    %381 = sbr.rel (0) target = $region53
  $region52: #{decoder_forward.1} parent=0 // pred_region
    _
  $region53: #{decoder_forward.1} parent=0 // pred_fallthru
    _
  // Predicated region
  $region54: #{decoder_forward.1} parent=0 // pred_check
    _
  $region55: #{decoder_forward.1} parent=0 // pred_check_branch
    %383 = sbr.rel (0) target = $region57
  $region56: #{decoder_forward.1} parent=0 // pred_region
    _
  $region57: #{decoder_forward.1} parent=0 // pred_fallthru
    _

</llo_original>
